<compile_context>
chip_gen: v6e
topology: v6e:2x2x1
jax: 0.10.0
libtpu: 0.0.40
codegen_flags: <defaults>
</compile_context>

<pallas_src>
import functools
import math

import jax
import jax.numpy as jnp
from jax import lax
from jax.experimental import pallas as pl
from jax.experimental.pallas import tpu as pltpu


def _round_up(x, m):
    return ((x + m - 1) // m) * m


def _attention_head_kernel(x_ref, w_ref, out_ref, *, tp, cp):
    # x_ref:   (b_blk*Tp, Cp) bf16 -- tokens, seq padded to Tp, head dim to Cp
    # w_ref:   (Cp, 3*Cp)     bf16 -- [Wq.T * C**-0.5 | Wk.T | Wv.T], padded
    # out_ref: (b_blk*Tp, Cp) f32
    rows = x_ref.shape[0]
    b_blk = rows // tp

    # Fused QKV projection for the whole batch chunk: ONE MXU matmul on a
    # lane-dense 2-D slab, f32 accumulation.
    qkv = jnp.dot(x_ref[...], w_ref[...],
                  preferred_element_type=jnp.float32)        # (rows, 3*Cp)

    # Causal mask, hoisted out of the per-example loop (no repeated iotas).
    row = lax.broadcasted_iota(jnp.int32, (tp, tp), 0)
    col = lax.broadcasted_iota(jnp.int32, (tp, tp), 1)
    causal = col <= row                                      # tril == 1

    for b in range(b_blk):                                   # small static unroll
        r0 = b * tp
        q = qkv[r0:r0 + tp, 0 * cp:1 * cp].astype(jnp.bfloat16)  # scale folded in
        k = qkv[r0:r0 + tp, 1 * cp:2 * cp].astype(jnp.bfloat16)
        v = qkv[r0:r0 + tp, 2 * cp:3 * cp].astype(jnp.bfloat16)

        # scores[i, j] = sum_c q[i, c] * k[j, c] (transpose via contraction dims)
        scores = lax.dot_general(
            q, k,
            dimension_numbers=(((1,), (1,)), ((), ())),
            preferred_element_type=jnp.float32)              # (Tp, Tp) f32

        # masked_fill(tril == 0, -inf): the diagonal is always kept, so the
        # max-subtraction never yields NaNs (even for zero-padded rows).
        scores = jnp.where(causal, scores, -jnp.inf)

        # Numerically stable softmax in f32; reciprocal on the (idle) EUP slot.
        scores = scores - jnp.max(scores, axis=-1, keepdims=True)
        p = jnp.exp(scores)
        p = p * pl.reciprocal(jnp.sum(p, axis=-1, keepdims=True), approx=True)

        # TODO(synk): nn.Dropout on the attention weights is identity in eval
        # mode; training-time dropout would use pltpu.prng_seed/prng_random_bits.

        out = jnp.dot(p.astype(jnp.bfloat16), v,
                      preferred_element_type=jnp.float32)    # (Tp, Cp)
        out_ref[r0:r0 + tp, :] = out.astype(out_ref.dtype)   # lane-dense store


def prepare_qkv_weight(wq, wk, wv):
    """One-time weight prep (outside the hot path).

    PyTorch nn.Linear weights are (out, in) with y = x @ W.T.  Transpose to
    (in, out), fold the C**-0.5 attention scale into the query projection,
    zero-pad the head dim up to a multiple of 128 lanes, fuse into a single
    (Cp, 3*Cp) bf16 weight so the kernel does one QKV matmul.
    """
    c = wq.shape[1]
    cp = _round_up(c, 128)
    scale = c ** (-0.5)

    def pad(w_t):  # (C, C) -> (Cp, Cp); zero padding keeps the math exact
        return jnp.pad(w_t, ((0, cp - c), (0, cp - c)))

    w_qkv = jnp.concatenate([pad(wq.T * scale), pad(wk.T), pad(wv.T)], axis=1)
    return w_qkv.astype(jnp.bfloat16)                        # (Cp, 3*Cp)


@jax.jit
def attention_head(toks, w_qkv):
    """toks: (B, T, C) float32.  w_qkv: output of prepare_qkv_weight()."""
    B, T, C = toks.shape
    Cp = w_qkv.shape[0]
    Tp = _round_up(T, 8)                                     # sublane-aligned seq

    # Zero-pad to (B, Tp, Cp), cast to bf16 (halves input DMA bytes, feeds the
    # MXU directly), and flatten to a lane-dense 2-D slab.  Padded key columns
    # are auto-masked by causality; padded query rows are discarded below.
    x = jnp.pad(toks, ((0, 0), (0, Tp - T), (0, Cp - C))).astype(jnp.bfloat16)
    x2d = x.reshape(B * Tp, Cp)

    # Batch chunk per grid step: as many examples as fit a ~256 KiB block
    # (amortizes per-step pipeline overhead) but capped so the static unroll
    # inside the kernel stays small.  Grid stays exact (B % b_blk == 0).
    bytes_per_example = Tp * Cp * (2 + 4)                    # bf16 in + f32 out
    b_blk = max(1, min(B, 8, (256 * 1024) // bytes_per_example))
    while B % b_blk:
        b_blk -= 1
    rows_blk = b_blk * Tp

    kernel = functools.partial(_attention_head_kernel, tp=Tp, cp=Cp)
    out2d = pl.pallas_call(
        kernel,
        out_shape=jax.ShapeDtypeStruct((B * Tp, Cp), jnp.float32),
        grid_spec=pltpu.PrefetchScalarGridSpec(
            num_scalar_prefetch=0,
            grid=(B // b_blk,),
            in_specs=[
                pl.BlockSpec((rows_blk, Cp), lambda i: (i, 0)),
                pl.BlockSpec((Cp, 3 * Cp), lambda i: (0, 0)),
            ],
            out_specs=pl.BlockSpec((rows_blk, Cp), lambda i: (i, 0)),
        ),
        compiler_params=pltpu.CompilerParams(
            dimension_semantics=("parallel",),
        ),
    )(x2d, w_qkv)

    out = out2d.reshape(B, Tp, Cp)[:, :T, :C]                # strip padding
    return out.astype(toks.dtype)


def attention_head_reference_f32(toks, wq, wk, wv):
    """Pure-JAX f32 reference mirroring the PyTorch forward (eval mode)."""
    B, T, C = toks.shape
    q = toks @ wq.T
    k = toks @ wk.T
    v = toks @ wv.T
    scores = (q @ jnp.swapaxes(k, -2, -1)) * (C ** (-0.5))
    mask = jnp.tril(jnp.ones((T, T), dtype=bool))
    scores = jnp.where(mask[None, :, :], scores, -jnp.inf)
    p = jax.nn.softmax(scores, axis=-1)
    return p @ v


def attention_head_reference_bf16(toks, wq, wk, wv):
    """Reference using the same bf16 matmul operands / f32 accumulation as the kernel."""
    B, T, C = toks.shape
    scale = C ** (-0.5)
    f32 = jnp.float32
    x = toks.astype(jnp.bfloat16)
    q = jnp.einsum("btc,cd->btd", x, (wq.T * scale).astype(jnp.bfloat16),
                   preferred_element_type=f32)
    k = jnp.einsum("btc,cd->btd", x, wk.T.astype(jnp.bfloat16),
                   preferred_element_type=f32)
    v = jnp.einsum("btc,cd->btd", x, wv.T.astype(jnp.bfloat16),
                   preferred_element_type=f32)
    s = jnp.einsum("bqc,bkc->bqk", q.astype(jnp.bfloat16), k.astype(jnp.bfloat16),
                   preferred_element_type=f32)
    mask = jnp.tril(jnp.ones((T, T), dtype=bool))
    s = jnp.where(mask[None, :, :], s, -jnp.inf)
    p = jax.nn.softmax(s, axis=-1)
    return jnp.einsum("bqk,bkc->bqc", p.astype(jnp.bfloat16), v.astype(jnp.bfloat16),
                      preferred_element_type=f32)


if __name__ == "__main__":
    # Module hyperparams: head_size=C, block_size >= T, dropout (eval => identity).
    B, T, C = 2, 8, 32          # batch, seq (<= block_size), head_size
    head_size = C

    key = jax.random.PRNGKey(0)
    k_toks, k_q, k_k, k_v = jax.random.split(key, 4)

    toks = jax.random.normal(k_toks, (B, T, C), dtype=jnp.float32)

    # Deterministic nn.Linear-style init: U(-1/sqrt(in), 1/sqrt(in)), (out, in).
    bound = 1.0 / math.sqrt(head_size)
    wq = jax.random.uniform(k_q, (head_size, head_size), jnp.float32, -bound, bound)
    wk = jax.random.uniform(k_k, (head_size, head_size), jnp.float32, -bound, bound)
    wv = jax.random.uniform(k_v, (head_size, head_size), jnp.float32, -bound, bound)

    # One-time weight prep (outside the jitted hot path).
    w_qkv = prepare_qkv_weight(wq, wk, wv)

    out = attention_head(toks, w_qkv)
    out = jax.block_until_ready(out)
    assert out.shape == (B, T, C)

    # Tight check vs. a reference with the same bf16 matmul operands.
    ref_bf16 = attention_head_reference_bf16(toks, wq, wk, wv)
    assert jnp.allclose(out, ref_bf16, atol=5e-3, rtol=5e-3), "mismatch vs bf16 reference"

    # Loose check vs. the exact f32 module semantics (bf16 MXU inputs).
    ref_f32 = attention_head_reference_f32(toks, wq, wk, wv)
    assert jnp.allclose(out, ref_f32, atol=5e-2, rtol=5e-2), "mismatch vs f32 reference"

    print("KERNEL_OK")
</pallas_src>

<mosaic_0001>
module attributes {stable_mosaic.version = 11 : i64} {
  func.func @_attention_head_kernel(%arg0: i32, %arg1: memref<16x128xbf16, #tpu.memory_space<vmem>>, %arg2: memref<128x384xbf16, #tpu.memory_space<vmem>>, %arg3: memref<16x128xf32, #tpu.memory_space<vmem>>) attributes {dimension_semantics = [#tpu.dimension_semantics<parallel>], iteration_bounds = array<i64: 1>, scalar_prefetch = 0 : i64, scratch_operands = 0 : i64, tpu.core_type = #tpu.core_type<tc>, window_params = [{transform_indices = @transform_0, window_bounds = array<i64: 16, 128>}, {pipeline_mode = #tpu.pipeline_mode<synchronous>, transform_indices = @transform_1, window_bounds = array<i64: 128, 384>}, {transform_indices = @transform_2, window_bounds = array<i64: 16, 128>}]} {
    %c0 = arith.constant 0 : index
    %c0_0 = arith.constant 0 : index
    %0 = vector.load %arg1[%c0, %c0_0] : memref<16x128xbf16, #tpu.memory_space<vmem>>, vector<16x128xbf16>
    %c0_1 = arith.constant 0 : index
    %c0_2 = arith.constant 0 : index
    %1 = vector.load %arg2[%c0_1, %c0_2] : memref<128x384xbf16, #tpu.memory_space<vmem>>, vector<128x384xbf16>
    %cst = arith.constant dense<0.000000e+00> : vector<16x384xf32>
    %2 = tpu.matmul %0, %1, %cst {dimension_numbers = #tpu.dot_dimension_numbers<[1], [0], [0], [1], [0, 0, 1, 1], [], []>} : vector<16x128xbf16>, vector<128x384xbf16>, vector<16x384xf32> -> vector<16x384xf32>
    %3 = tpu.iota {dimensions = array<i32: 0>} : vector<8x8xi32>
    %4 = tpu.iota {dimensions = array<i32: 1>} : vector<8x8xi32>
    %5 = arith.cmpi sle, %4, %3 : vector<8x8xi32>
    %6 = vector.extract_strided_slice %2 {offsets = [0, 0], sizes = [8, 128], strides = [1, 1]} : vector<16x384xf32> to vector<8x128xf32>
    %7 = arith.truncf %6 : vector<8x128xf32> to vector<8x128xbf16>
    %8 = vector.extract_strided_slice %2 {offsets = [0, 128], sizes = [8, 128], strides = [1, 1]} : vector<16x384xf32> to vector<8x128xf32>
    %9 = arith.truncf %8 : vector<8x128xf32> to vector<8x128xbf16>
    %10 = vector.extract_strided_slice %2 {offsets = [0, 256], sizes = [8, 128], strides = [1, 1]} : vector<16x384xf32> to vector<8x128xf32>
    %11 = arith.truncf %10 : vector<8x128xf32> to vector<8x128xbf16>
    %cst_3 = arith.constant dense<0.000000e+00> : vector<8x8xf32>
    %12 = tpu.matmul %7, %9, %cst_3 {dimension_numbers = #tpu.dot_dimension_numbers<[1], [1], [0], [0], [0, 0, 1, 0], [], []>} : vector<8x128xbf16>, vector<8x128xbf16>, vector<8x8xf32> -> vector<8x8xf32>
    %cst_4 = arith.constant 0xFF800000 : f32
    %13 = vector.broadcast %cst_4 : f32 to vector<8x8xf32>
    %14 = arith.select %5, %12, %13 : vector<8x8xi1>, vector<8x8xf32>
    %cst_5 = arith.constant dense<0xFF800000> : vector<8xf32>
    %15 = vector.multi_reduction <maximumf>, %14, %cst_5 [1] : vector<8x8xf32> to vector<8xf32>
    %16 = vector.shape_cast %15 : vector<8xf32> to vector<8x1xf32>
    %17 = vector.broadcast %16 : vector<8x1xf32> to vector<8x8xf32>
    %18 = arith.subf %14, %17 : vector<8x8xf32>
    %19 = math.exp %18 : vector<8x8xf32>
    %cst_6 = arith.constant dense<0.000000e+00> : vector<8xf32>
    %20 = vector.multi_reduction <add>, %19, %cst_6 [1] : vector<8x8xf32> to vector<8xf32>
    %21 = vector.shape_cast %20 : vector<8xf32> to vector<8x1xf32>
    %22 = tpu.reciprocal %21 {approx = true} : vector<8x1xf32> -> vector<8x1xf32>
    %23 = vector.broadcast %22 : vector<8x1xf32> to vector<8x8xf32>
    %24 = arith.mulf %19, %23 : vector<8x8xf32>
    %25 = arith.truncf %24 : vector<8x8xf32> to vector<8x8xbf16>
    %cst_7 = arith.constant dense<0.000000e+00> : vector<8x128xf32>
    %26 = tpu.matmul %25, %11, %cst_7 {dimension_numbers = #tpu.dot_dimension_numbers<[1], [0], [0], [1], [0, 0, 1, 1], [], []>} : vector<8x8xbf16>, vector<8x128xbf16>, vector<8x128xf32> -> vector<8x128xf32>
    %c0_8 = arith.constant 0 : index
    %c0_9 = arith.constant 0 : index
    %27 = vector.load %arg3[%c0_8, %c0_9] : memref<16x128xf32, #tpu.memory_space<vmem>>, vector<8x128xf32>
    tpu.vector_store %arg3[%c0_8, %c0_9], %26 {strides = array<i32>} : memref<16x128xf32, #tpu.memory_space<vmem>>, vector<8x128xf32>,
    %28 = vector.extract_strided_slice %2 {offsets = [8, 0], sizes = [8, 128], strides = [1, 1]} : vector<16x384xf32> to vector<8x128xf32>
    %29 = arith.truncf %28 : vector<8x128xf32> to vector<8x128xbf16>
    %30 = vector.extract_strided_slice %2 {offsets = [8, 128], sizes = [8, 128], strides = [1, 1]} : vector<16x384xf32> to vector<8x128xf32>
    %31 = arith.truncf %30 : vector<8x128xf32> to vector<8x128xbf16>
    %32 = vector.extract_strided_slice %2 {offsets = [8, 256], sizes = [8, 128], strides = [1, 1]} : vector<16x384xf32> to vector<8x128xf32>
    %33 = arith.truncf %32 : vector<8x128xf32> to vector<8x128xbf16>
    %cst_10 = arith.constant dense<0.000000e+00> : vector<8x8xf32>
    %34 = tpu.matmul %29, %31, %cst_10 {dimension_numbers = #tpu.dot_dimension_numbers<[1], [1], [0], [0], [0, 0, 1, 0], [], []>} : vector<8x128xbf16>, vector<8x128xbf16>, vector<8x8xf32> -> vector<8x8xf32>
    %cst_11 = arith.constant 0xFF800000 : f32
    %35 = vector.broadcast %cst_11 : f32 to vector<8x8xf32>
    %36 = arith.select %5, %34, %35 : vector<8x8xi1>, vector<8x8xf32>
    %cst_12 = arith.constant dense<0xFF800000> : vector<8xf32>
    %37 = vector.multi_reduction <maximumf>, %36, %cst_12 [1] : vector<8x8xf32> to vector<8xf32>
    %38 = vector.shape_cast %37 : vector<8xf32> to vector<8x1xf32>
    %39 = vector.broadcast %38 : vector<8x1xf32> to vector<8x8xf32>
    %40 = arith.subf %36, %39 : vector<8x8xf32>
    %41 = math.exp %40 : vector<8x8xf32>
    %cst_13 = arith.constant dense<0.000000e+00> : vector<8xf32>
    %42 = vector.multi_reduction <add>, %41, %cst_13 [1] : vector<8x8xf32> to vector<8xf32>
    %43 = vector.shape_cast %42 : vector<8xf32> to vector<8x1xf32>
    %44 = tpu.reciprocal %43 {approx = true} : vector<8x1xf32> -> vector<8x1xf32>
    %45 = vector.broadcast %44 : vector<8x1xf32> to vector<8x8xf32>
    %46 = arith.mulf %41, %45 : vector<8x8xf32>
    %47 = arith.truncf %46 : vector<8x8xf32> to vector<8x8xbf16>
    %cst_14 = arith.constant dense<0.000000e+00> : vector<8x128xf32>
    %48 = tpu.matmul %47, %33, %cst_14 {dimension_numbers = #tpu.dot_dimension_numbers<[1], [0], [0], [1], [0, 0, 1, 1], [], []>} : vector<8x8xbf16>, vector<8x128xbf16>, vector<8x128xf32> -> vector<8x128xf32>
    %c8 = arith.constant 8 : index
    %c0_15 = arith.constant 0 : index
    %49 = vector.load %arg3[%c8, %c0_15] : memref<16x128xf32, #tpu.memory_space<vmem>>, vector<8x128xf32>
    tpu.vector_store %arg3[%c8, %c0_15], %48 {strides = array<i32>} : memref<16x128xf32, #tpu.memory_space<vmem>>, vector<8x128xf32>,
    return
  }
  func.func @transform_0(%arg0: i32) -> (i32, i32) {
    %c0_i32 = arith.constant 0 : i32
    %c0_i32_0 = arith.constant 0 : i32
    return %arg0, %c0_i32 : i32, i32
  }
  func.func @transform_1(%arg0: i32) -> (i32, i32) {
    %c0_i32 = arith.constant 0 : i32
    %c0_i32_0 = arith.constant 0 : i32
    %c0_i32_1 = arith.constant 0 : i32
    return %c0_i32, %c0_i32_0 : i32, i32
  }
  func.func @transform_2(%arg0: i32) -> (i32, i32) {
    %c0_i32 = arith.constant 0 : i32
    %c0_i32_0 = arith.constant 0 : i32
    return %arg0, %c0_i32 : i32, i32
  }
}

</mosaic_0001>

<llo_original>
// kernel: attention_head.1
$region0: #{attention_head.1}
  #allocation0 [shape = 'u32[]', space=smem, size = 0x4, offset = 0x4, fixed_abs, tag = 'smem constant byte address 0x4 - core index']
  #allocation1 [shape = 'u32[144,128]{1,0:T(1,128)}', space=vmem, size = 0x12000, scoped, tag = 'internal scratch']
  %s0 = inlined_call_operand.vmem [shape: bf16[16,128], index: 0, kind: input, shape index: {}]
  %s1 = inlined_call_operand.hbm [shape: bf16[128,384], index: 1, kind: input, shape index: {}]
  %s2 = inlined_call_operand.hbm [shape: f32[16,128], index: 2, kind: output, shape index: {}]
  %s3 = sld [smem:[#allocation0]]
  $region22: #{attention_head.1} parent=0
    _
  %s5 = ssub.s32 1, %s3
  %s6 = scalar_select 0, %s5, %s3
  $region1: #{attention_head.1} parent=0
    #allocation2 [shape = 'u8[98304]{0}', space=vmem, size = 0x18000, scoped, tag = 'input window, operand 1, single buffered']
    #allocation3 [shape = 's32[1]{0}', space=sflag, size = 0x4, scoped, tag = 'scoped memory for attention_head.1']
    #allocation4 [shape = 's32[1]{0}', space=sflag, size = 0x4, scoped, tag = 'scoped memory for attention_head.1']
    #allocation5 [shape = 'u8[8192]{0}', space=vmem, size = 0x2000, scoped, tag = 'output window, operand 0, single buffered']
    %7 = vsyncpa [#allocation3], 0
    %8 = vsyncpa [#allocation4], 0
    // Predicated region
    $region2: #{attention_head.1} parent=1 // pred_check
      _
    $region3: #{attention_head.1} parent=1 // pred_check_branch
      %10 = sbr.rel (0) target = $region5
    $region4: #{attention_head.1} parent=1 // pred_region
      _
    $region5: #{attention_head.1} parent=1 // pred_fallthru
      _
    // Predicated region
    $region6: #{attention_head.1} parent=1 // pred_check
      _
    $region7: #{attention_head.1} parent=1 // pred_check_branch
      %12 = sbr.rel (0) target = $region9
    $region8: #{attention_head.1} parent=1 // pred_region
      %s14 = ssub.s32 3072, 3072
      %15 = vsyncadd [#allocation3], %s14
      %s16 = sshll.u32 [#allocation2], 4
      %s17 = int_to_ptr.vmem [resolvable:$true] %s16
      %22 = dma.hbm_to_vmem [thread:$0]  %s1, 3072, %s17, [#allocation3], 192, 192, 12
    $region9: #{attention_head.1} parent=1 // pred_fallthru
      _
    // Predicated region
    $region10: #{attention_head.1} parent=1 // pred_check
      _
    $region11: #{attention_head.1} parent=1 // pred_check_branch
      %24 = sbr.rel (0) target = $region13
    $region12: #{attention_head.1} parent=1 // pred_region
      %25 = dma.done [#allocation3], 3072
    $region13: #{attention_head.1} parent=1 // pred_fallthru
      _
    %v27 = vld [vmem:[%s0] sm:$0xf]
    %v28 = vld [vmem:[%s0 + $0x4] sm:$0xf]
    %v29 = vld [vmem:[#allocation2] sm:$0xff]
    %v30 = vld [vmem:[#allocation2 + $0x8] sm:$0xf]
    %v31 = vld [vmem:[#allocation2 + $0xc] sm:$0xff]
    %v32 = vld [vmem:[#allocation2 + $0x14] sm:$0xf]
    %v33 = vld [vmem:[#allocation2 + $0x18] sm:$0xff]
    %v34 = vld [vmem:[#allocation2 + $0x20] sm:$0xf]
    %v35 = vld [vmem:[#allocation2 + $0x24] sm:$0xff]
    %v36 = vld [vmem:[#allocation2 + $0x2c] sm:$0xf]
    %v37 = vld [vmem:[#allocation2 + $0x30] sm:$0xff]
    %v38 = vld [vmem:[#allocation2 + $0x38] sm:$0xf]
    %v39 = vld [vmem:[#allocation2 + $0x3c] sm:$0xff]
    %v40 = vld [vmem:[#allocation2 + $0x44] sm:$0xf]
    %v41 = vld [vmem:[#allocation2 + $0x48] sm:$0xff]
    %v42 = vld [vmem:[#allocation2 + $0x50] sm:$0xf]
    %v43 = vld [vmem:[#allocation2 + $0x54] sm:$0xff]
    %v44 = vld [vmem:[#allocation2 + $0x5c] sm:$0xf]
    %v45 = vld [vmem:[#allocation2 + $0x60] sm:$0xff]
    %v46 = vld [vmem:[#allocation2 + $0x68] sm:$0xf]
    %v47 = vld [vmem:[#allocation2 + $0x6c] sm:$0xff]
    %v48 = vld [vmem:[#allocation2 + $0x74] sm:$0xf]
    %v49 = vld [vmem:[#allocation2 + $0x78] sm:$0xff]
    %v50 = vld [vmem:[#allocation2 + $0x80] sm:$0xf]
    %v51 = vld [vmem:[#allocation2 + $0x84] sm:$0xff]
    %v52 = vld [vmem:[#allocation2 + $0x8c] sm:$0xf]
    %v53 = vld [vmem:[#allocation2 + $0x90] sm:$0xff]
    %v54 = vld [vmem:[#allocation2 + $0x98] sm:$0xf]
    %v55 = vld [vmem:[#allocation2 + $0x9c] sm:$0xff]
    %v56 = vld [vmem:[#allocation2 + $0xa4] sm:$0xf]
    %v57 = vld [vmem:[#allocation2 + $0xa8] sm:$0xff]
    %v58 = vld [vmem:[#allocation2 + $0xb0] sm:$0xf]
    %v59 = vld [vmem:[#allocation2 + $0xb4] sm:$0xff]
    %v60 = vld [vmem:[#allocation2 + $0xbc] sm:$0xf]
    %v63 = vunpack.c.l.b16 %v27
    %v64 = vunpack.c.l.b16 %v28
    %v65 = vpack.c.b16 %v64, %v63
    %v99 = vunpack.c.l.b16 %v29
    %v100 = vunpack.c.h.b16 %v29
    %v101 = vunpack.c.l.b16 %v30
    %v102 = vunpack.c.l.b16 %v31
    %v103 = vunpack.c.h.b16 %v31
    %v104 = vunpack.c.l.b16 %v32
    %v105 = vunpack.c.l.b16 %v33
    %v106 = vunpack.c.h.b16 %v33
    %v107 = vunpack.c.l.b16 %v34
    %v108 = vunpack.c.l.b16 %v35
    %v109 = vunpack.c.h.b16 %v35
    %v110 = vunpack.c.l.b16 %v36
    %v111 = vunpack.c.l.b16 %v37
    %v112 = vunpack.c.h.b16 %v37
    %v113 = vunpack.c.l.b16 %v38
    %v114 = vunpack.c.l.b16 %v39
    %v115 = vunpack.c.h.b16 %v39
    %v116 = vunpack.c.l.b16 %v40
    %v117 = vunpack.c.l.b16 %v41
    %v118 = vunpack.c.h.b16 %v41
    %v119 = vunpack.c.l.b16 %v42
    %v120 = vunpack.c.l.b16 %v43
    %v121 = vunpack.c.h.b16 %v43
    %v122 = vunpack.c.l.b16 %v44
    %v123 = vunpack.c.l.b16 %v45
    %v124 = vunpack.c.h.b16 %v45
    %v125 = vunpack.c.l.b16 %v46
    %v126 = vunpack.c.l.b16 %v47
    %v127 = vunpack.c.h.b16 %v47
    %v128 = vunpack.c.l.b16 %v48
    %v129 = vunpack.c.l.b16 %v49
    %v130 = vunpack.c.h.b16 %v49
    %v131 = vunpack.c.l.b16 %v50
    %v132 = vunpack.c.l.b16 %v51
    %v133 = vunpack.c.h.b16 %v51
    %v134 = vunpack.c.l.b16 %v52
    %v135 = vunpack.c.l.b16 %v53
    %v136 = vunpack.c.h.b16 %v53
    %v137 = vunpack.c.l.b16 %v54
    %v138 = vunpack.c.l.b16 %v55
    %v139 = vunpack.c.h.b16 %v55
    %v140 = vunpack.c.l.b16 %v56
    %v141 = vunpack.c.l.b16 %v57
    %v142 = vunpack.c.h.b16 %v57
    %v143 = vunpack.c.l.b16 %v58
    %v144 = vunpack.c.l.b16 %v59
    %v145 = vunpack.c.h.b16 %v59
    %v146 = vunpack.c.l.b16 %v60
    %v147 = vpack.c.b16 %v102, %v99
    %v148 = vpack.c.b16 %v103, %v100
    %v149 = vpack.c.b16 %v104, %v101
    %v150 = vpack.c.b16 %v108, %v105
    %v151 = vpack.c.b16 %v109, %v106
    %v152 = vpack.c.b16 %v110, %v107
    %v153 = vpack.c.b16 %v114, %v111
    %v154 = vpack.c.b16 %v115, %v112
    %v155 = vpack.c.b16 %v116, %v113
    %v156 = vpack.c.b16 %v120, %v117
    %v157 = vpack.c.b16 %v121, %v118
    %v158 = vpack.c.b16 %v122, %v119
    %v159 = vpack.c.b16 %v126, %v123
    %v160 = vpack.c.b16 %v127, %v124
    %v161 = vpack.c.b16 %v128, %v125
    %v162 = vpack.c.b16 %v132, %v129
    %v163 = vpack.c.b16 %v133, %v130
    %v164 = vpack.c.b16 %v134, %v131
    %v165 = vpack.c.b16 %v138, %v135
    %v166 = vpack.c.b16 %v139, %v136
    %v167 = vpack.c.b16 %v140, %v137
    %v168 = vpack.c.b16 %v144, %v141
    %v169 = vpack.c.b16 %v145, %v142
    %v170 = vpack.c.b16 %v146, %v143
    %195 = vmatprep.subr.bf16.mxu0 %v169
    %196 = vmatpush1.bf16.msra.mxu0 %v168
    %197 = vmatprep.subr.bf16.mxu0 %v166
    %198 = vmatpush1.bf16.msra.mxu0 %v165
    %199 = vmatprep.subr.bf16.mxu0 %v163
    %200 = vmatpush1.bf16.msra.mxu0 %v162
    %201 = vmatprep.subr.bf16.mxu0 %v160
    %202 = vmatpush1.bf16.msra.mxu0 %v159
    %203 = vmatprep.subr.bf16.mxu0 %v157
    %204 = vmatpush1.bf16.msra.mxu0 %v156
    %205 = vmatprep.subr.bf16.mxu0 %v154
    %206 = vmatpush1.bf16.msra.mxu0 %v153
    %207 = vmatprep.subr.bf16.mxu0 %v151
    %208 = vmatpush1.bf16.msra.mxu0 %v150
    %209 = vmatprep.subr.bf16.mxu0 %v148
    %210 = vmatpush1.bf16.msra.mxu0 %v147
    %211 = vmatprep.subr.bf16.mxu0 0
    %212 = vmatpush2.bf16.msra.mxu0 0
    %213 = vmatprep.subr.bf16.mxu0 0
    %214 = vmatpush2.bf16.msra.mxu0 0
    %215 = vmatprep.subr.bf16.mxu0 0
    %216 = vmatpush2.bf16.msra.mxu0 0
    %217 = vmatprep.subr.bf16.mxu0 0
    %218 = vmatpush2.bf16.msra.mxu0 0
    %219 = vmatprep.subr.bf16.mxu0 0
    %220 = vmatpush2.bf16.msra.mxu0 0
    %221 = vmatprep.subr.bf16.mxu0 0
    %222 = vmatpush2.bf16.msra.mxu0 0
    %223 = vmatprep.subr.bf16.mxu0 0
    %224 = vmatpush2.bf16.msra.mxu0 0
    %225 = vmatprep.subr.bf16.mxu0 0
    %226 = vmatpush2.bf16.msra.mxu0 0
    %227 = vmatprep.mubr.bf16.mxu0 0
    %228 = vmatmul.mubr.bf16.gmra.mxu0 %v65
    %v229 = vpop.f32.mrf.mxu0
    %v230 = vadd.f32 0.0, %v229
    %v231 = vpop.f32.mrf.mxu0
    %v232 = vadd.f32 0.0, %v231
    %v233 = vpop.f32.mrf.mxu0
    %v234 = vadd.f32 0.0, %v233
    %v235 = vpop.f32.mrf.mxu0
    %v236 = vadd.f32 0.0, %v235
    %237 = vdwg.mxu0
    %238 = vmatprep.subr.bf16.mxu0 0
    %239 = vmatpush1.bf16.msra.mxu0 %v170
    %240 = vmatprep.subr.bf16.mxu0 0
    %241 = vmatpush1.bf16.msra.mxu0 %v167
    %242 = vmatprep.subr.bf16.mxu0 0
    %243 = vmatpush1.bf16.msra.mxu0 %v164
    %244 = vmatprep.subr.bf16.mxu0 0
    %245 = vmatpush1.bf16.msra.mxu0 %v161
    %246 = vmatprep.subr.bf16.mxu0 0
    %247 = vmatpush1.bf16.msra.mxu0 %v158
    %248 = vmatprep.subr.bf16.mxu0 0
    %249 = vmatpush1.bf16.msra.mxu0 %v155
    %250 = vmatprep.subr.bf16.mxu0 0
    %251 = vmatpush1.bf16.msra.mxu0 %v152
    %252 = vmatprep.subr.bf16.mxu0 0
    %253 = vmatpush1.bf16.msra.mxu0 %v149
    %254 = vmatprep.subr.bf16.mxu0 0
    %255 = vmatpush2.bf16.msra.mxu0 0
    %256 = vmatprep.subr.bf16.mxu0 0
    %257 = vmatpush2.bf16.msra.mxu0 0
    %258 = vmatprep.subr.bf16.mxu0 0
    %259 = vmatpush2.bf16.msra.mxu0 0
    %260 = vmatprep.subr.bf16.mxu0 0
    %261 = vmatpush2.bf16.msra.mxu0 0
    %262 = vmatprep.subr.bf16.mxu0 0
    %263 = vmatpush2.bf16.msra.mxu0 0
    %264 = vmatprep.subr.bf16.mxu0 0
    %265 = vmatpush2.bf16.msra.mxu0 0
    %266 = vmatprep.subr.bf16.mxu0 0
    %267 = vmatpush2.bf16.msra.mxu0 0
    %268 = vmatprep.subr.bf16.mxu0 0
    %269 = vmatpush2.bf16.msra.mxu0 0
    %270 = vmatprep.mubr.bf16.mxu0 0
    %271 = vmatmul.mubr.bf16.gmra.mxu0 %v65
    %v272 = vpop.f32.mrf.mxu0
    %v273 = vadd.f32 0.0, %v272
    %v274 = vpop.f32.mrf.mxu0
    %v275 = vpop.f32.mrf.mxu0
    %v276 = vadd.f32 0.0, %v275
    %v277 = vpop.f32.mrf.mxu0
    %278 = vdwg.mxu0
    %v279 = vlaneseq
    %v280 = vshrl.u32 %v279, 7
    %v281 = vlaneseq
    %v282 = vand.u32 %v281, 127
    %vm283 = vcmp.le.s32.totalorder %v282, %v280
    %v284 = vpack.c.bf16 %v230, %v230
    %v285 = vpack.c.bf16 %v232, %v232
    %v286 = vpack.c.bf16 %v273, %v273
    %287 = vmatprep.subr.bf16.mxu0 0
    %288 = vmatpush1.bf16.xpose.msra.mxu0 0
    %289 = vmatprep.subr.bf16.mxu0 0
    %290 = vmatpush1.bf16.xpose.msra.mxu0 0
    %291 = vmatprep.subr.bf16.mxu0 0
    %292 = vmatpush1.bf16.xpose.msra.mxu0 0
    %293 = vmatprep.subr.bf16.mxu0 0
    %294 = vmatpush1.bf16.xpose.msra.mxu0 0
    %295 = vmatprep.subr.bf16.mxu0 0
    %296 = vmatpush1.bf16.xpose.msra.mxu0 0
    %297 = vmatprep.subr.bf16.mxu0 0
    %298 = vmatpush1.bf16.xpose.msra.mxu0 0
    %299 = vmatprep.subr.bf16.mxu0 0
    %300 = vmatpush1.bf16.xpose.msra.mxu0 0
    %301 = vmatprep.subr.bf16.mxu0 0
    %302 = vmatpush1.bf16.xpose.msra.mxu0 %v285
    %303 = vmatprep.subr.bf16.mxu0 0
    %304 = vmatpush2.bf16.xpose.msra.mxu0 0
    %305 = vmatprep.subr.bf16.mxu0 0
    %306 = vmatpush2.bf16.xpose.msra.mxu0 0
    %307 = vmatprep.subr.bf16.mxu0 0
    %308 = vmatpush2.bf16.xpose.msra.mxu0 0
    %309 = vmatprep.subr.bf16.mxu0 0
    %310 = vmatpush2.bf16.xpose.msra.mxu0 0
    %311 = vmatprep.subr.bf16.mxu0 0
    %312 = vmatpush2.bf16.xpose.msra.mxu0 0
    %313 = vmatprep.subr.bf16.mxu0 0
    %314 = vmatpush2.bf16.xpose.msra.mxu0 0
    %315 = vmatprep.subr.bf16.mxu0 0
    %316 = vmatpush2.bf16.xpose.msra.mxu0 0
    %317 = vmatprep.subr.bf16.mxu0 0
    %318 = vmatpush2.bf16.xpose.msra.mxu0 0
    %319 = vmatprep.mubr.bf16.mxu0 0
    %320 = vmatmul.mubr.bf16.gmra.mxu0 %v284
    %v321 = vpop.f32.mrf.mxu0
    %v322 = vadd.f32 0.0, %v321
    %v323 = vpop.f32.mrf.mxu0
    %v324 = vpop.f32.mrf.mxu0
    %v325 = vpop.f32.mrf.mxu0
    %326 = vdwg.mxu0
    %v327 = vsel %vm283, %v322, -inf
    %vm328 = vcmask 64512
    %v329 = vsel %vm328, %v327, -inf
    %330 = vmax.xlane.f32.xlu0 %v329
    %v331 = vpop.xlane.xlu0 %330
    %v332 = vsub.f32 %v327, %v331
    %v333 = vmul.f32 %v332, 1.442695
    %v334 = vpow.pop %v333
    %v335 = vsel %vm328, %v334, 0.0
    %336 = vadd.xlane.f32.xlu0 %v335
    %v337 = vpop.xlane.xlu0 %336
    %v338 = vrcp.pop %v337
    %v339 = vmul.f32 %v334, %v338
    %v340 = vpack.c.bf16 %v339, %v339
    %v342 = vsel %vm328, %v340, 0
    %vm344 = vcmask 1043456
    %v346 = vsel %vm344, %v286, 0
    %348 = vmatprep.subr.bf16.mxu0 0
    %349 = vmatpush1.bf16.msra.mxu0 0
    %350 = vmatprep.subr.bf16.mxu0 0
    %351 = vmatpush1.bf16.msra.mxu0 0
    %352 = vmatprep.subr.bf16.mxu0 0
    %353 = vmatpush1.bf16.msra.mxu0 0
    %354 = vmatprep.subr.bf16.mxu0 0
    %355 = vmatpush1.bf16.msra.mxu0 0
    %356 = vmatprep.subr.bf16.mxu0 0
    %357 = vmatpush1.bf16.msra.mxu0 0
    %358 = vmatprep.subr.bf16.mxu0 0
    %359 = vmatpush1.bf16.msra.mxu0 0
    %360 = vmatprep.subr.bf16.mxu0 0
    %361 = vmatpush1.bf16.msra.mxu0 0
    %362 = vmatprep.subr.bf16.mxu0 0
    %363 = vmatpush1.bf16.msra.mxu0 %v346
    %364 = vmatprep.subr.bf16.mxu0 0
    %365 = vmatpush2.bf16.msra.mxu0 0
    %366 = vmatprep.subr.bf16.mxu0 0
    %367 = vmatpush2.bf16.msra.mxu0 0
    %368 = vmatprep.subr.bf16.mxu0 0
    %369 = vmatpush2.bf16.msra.mxu0 0
    %370 = vmatprep.subr.bf16.mxu0 0
    %371 = vmatpush2.bf16.msra.mxu0 0
    %372 = vmatprep.subr.bf16.mxu0 0
    %373 = vmatpush2.bf16.msra.mxu0 0
    %374 = vmatprep.subr.bf16.mxu0 0
    %375 = vmatpush2.bf16.msra.mxu0 0
    %376 = vmatprep.subr.bf16.mxu0 0
    %377 = vmatpush2.bf16.msra.mxu0 0
    %378 = vmatprep.subr.bf16.mxu0 0
    %379 = vmatpush2.bf16.msra.mxu0 0
    %380 = vmatprep.mubr.bf16.mxu0 0
    %381 = vmatmul.mubr.bf16.gmra.mxu0 %v342
    %v382 = vpop.f32.mrf.mxu0
    %v383 = vadd.f32 0.0, %v382
    %v384 = vpop.f32.mrf.mxu0
    %v385 = vpop.f32.mrf.mxu0
    %v386 = vpop.f32.mrf.mxu0
    %387 = vdwg.mxu0
    %388 = vst [vmem:[#allocation5] sm:$0xff] %v383
    %v389 = vpack.c.bf16 %v234, %v234
    %v390 = vpack.c.bf16 %v236, %v236
    %v391 = vpack.c.bf16 %v276, %v276
    %392 = vmatprep.subr.bf16.mxu0 0
    %393 = vmatpush1.bf16.xpose.msra.mxu0 0
    %394 = vmatprep.subr.bf16.mxu0 0
    %395 = vmatpush1.bf16.xpose.msra.mxu0 0
    %396 = vmatprep.subr.bf16.mxu0 0
    %397 = vmatpush1.bf16.xpose.msra.mxu0 0
    %398 = vmatprep.subr.bf16.mxu0 0
    %399 = vmatpush1.bf16.xpose.msra.mxu0 0
    %400 = vmatprep.subr.bf16.mxu0 0
    %401 = vmatpush1.bf16.xpose.msra.mxu0 0
    %402 = vmatprep.subr.bf16.mxu0 0
    %403 = vmatpush1.bf16.xpose.msra.mxu0 0
    %404 = vmatprep.subr.bf16.mxu0 0
    %405 = vmatpush1.bf16.xpose.msra.mxu0 0
    %406 = vmatprep.subr.bf16.mxu0 0
    %407 = vmatpush1.bf16.xpose.msra.mxu0 %v390
    %408 = vmatprep.subr.bf16.mxu0 0
    %409 = vmatpush2.bf16.xpose.msra.mxu0 0
    %410 = vmatprep.subr.bf16.mxu0 0
    %411 = vmatpush2.bf16.xpose.msra.mxu0 0
    %412 = vmatprep.subr.bf16.mxu0 0
    %413 = vmatpush2.bf16.xpose.msra.mxu0 0
    %414 = vmatprep.subr.bf16.mxu0 0
    %415 = vmatpush2.bf16.xpose.msra.mxu0 0
    %416 = vmatprep.subr.bf16.mxu0 0
    %417 = vmatpush2.bf16.xpose.msra.mxu0 0
    %418 = vmatprep.subr.bf16.mxu0 0
    %419 = vmatpush2.bf16.xpose.msra.mxu0 0
    %420 = vmatprep.subr.bf16.mxu0 0
    %421 = vmatpush2.bf16.xpose.msra.mxu0 0
    %422 = vmatprep.subr.bf16.mxu0 0
    %423 = vmatpush2.bf16.xpose.msra.mxu0 0
    %424 = vmatprep.mubr.bf16.mxu0 0
    %425 = vmatmul.mubr.bf16.gmra.mxu0 %v389
    %v426 = vpop.f32.mrf.mxu0
    %v427 = vadd.f32 0.0, %v426
    %v428 = vpop.f32.mrf.mxu0
    %v429 = vpop.f32.mrf.mxu0
    %v430 = vpop.f32.mrf.mxu0
    %431 = vdwg.mxu0
    %v432 = vsel %vm283, %v427, -inf
    %v433 = vsel %vm328, %v432, -inf
    %434 = vmax.xlane.f32.xlu0 %v433
    %v435 = vpop.xlane.xlu0 %434
    %v436 = vsub.f32 %v432, %v435
    %v437 = vmul.f32 %v436, 1.442695
    %v438 = vpow.pop %v437
    %v439 = vsel %vm328, %v438, 0.0
    %440 = vadd.xlane.f32.xlu0 %v439
    %v441 = vpop.xlane.xlu0 %440
    %v442 = vrcp.pop %v441
    %v443 = vmul.f32 %v438, %v442
    %v444 = vpack.c.bf16 %v443, %v443
    %v446 = vsel %vm328, %v444, 0
    %v449 = vsel %vm344, %v391, 0
    %451 = vmatprep.subr.bf16.mxu0 0
    %452 = vmatpush1.bf16.msra.mxu0 0
    %453 = vmatprep.subr.bf16.mxu0 0
    %454 = vmatpush1.bf16.msra.mxu0 0
    %455 = vmatprep.subr.bf16.mxu0 0
    %456 = vmatpush1.bf16.msra.mxu0 0
    %457 = vmatprep.subr.bf16.mxu0 0
    %458 = vmatpush1.bf16.msra.mxu0 0
    %459 = vmatprep.subr.bf16.mxu0 0
    %460 = vmatpush1.bf16.msra.mxu0 0
    %461 = vmatprep.subr.bf16.mxu0 0
    %462 = vmatpush1.bf16.msra.mxu0 0
    %463 = vmatprep.subr.bf16.mxu0 0
    %464 = vmatpush1.bf16.msra.mxu0 0
    %465 = vmatprep.subr.bf16.mxu0 0
    %466 = vmatpush1.bf16.msra.mxu0 %v449
    %467 = vmatprep.subr.bf16.mxu0 0
    %468 = vmatpush2.bf16.msra.mxu0 0
    %469 = vmatprep.subr.bf16.mxu0 0
    %470 = vmatpush2.bf16.msra.mxu0 0
    %471 = vmatprep.subr.bf16.mxu0 0
    %472 = vmatpush2.bf16.msra.mxu0 0
    %473 = vmatprep.subr.bf16.mxu0 0
    %474 = vmatpush2.bf16.msra.mxu0 0
    %475 = vmatprep.subr.bf16.mxu0 0
    %476 = vmatpush2.bf16.msra.mxu0 0
    %477 = vmatprep.subr.bf16.mxu0 0
    %478 = vmatpush2.bf16.msra.mxu0 0
    %479 = vmatprep.subr.bf16.mxu0 0
    %480 = vmatpush2.bf16.msra.mxu0 0
    %481 = vmatprep.subr.bf16.mxu0 0
    %482 = vmatpush2.bf16.msra.mxu0 0
    %483 = vmatprep.mubr.bf16.mxu0 0
    %484 = vmatmul.mubr.bf16.gmra.mxu0 %v446
    %v485 = vpop.f32.mrf.mxu0
    %v486 = vadd.f32 0.0, %v485
    %v487 = vpop.f32.mrf.mxu0
    %v488 = vpop.f32.mrf.mxu0
    %v489 = vpop.f32.mrf.mxu0
    %490 = vdwg.mxu0
    %491 = vst [vmem:[#allocation5 + $0x8] sm:$0xff] %v486
    // Predicated region
    $region14: #{attention_head.1} parent=1 // pred_check
      _
    $region15: #{attention_head.1} parent=1 // pred_check_branch
      %493 = sbr.rel (0) target = $region17
    $region16: #{attention_head.1} parent=1 // pred_region
      %s495 = ssub.s32 256, 256
      %496 = vsyncadd [#allocation4], %s495
      %s497 = sshll.u32 [#allocation5], 4
      %s498 = int_to_ptr.vmem [resolvable:$true] %s497
      %503 = dma.vmem_to_hbm [thread:$0]  %s498, 256, %s2, [#allocation4], 128, 128, 8
    $region17: #{attention_head.1} parent=1 // pred_fallthru
      _
    // Predicated region
    $region18: #{attention_head.1} parent=1 // pred_check
      _
    $region19: #{attention_head.1} parent=1 // pred_check_branch
      %505 = sbr.rel (0) target = $region21
    $region20: #{attention_head.1} parent=1 // pred_region
      %506 = dma.done [#allocation4], 256
    $region21: #{attention_head.1} parent=1 // pred_fallthru
      _
    %507 = vsyncpa [#allocation3], 1
    %508 = vsyncpa [#allocation4], 1

</llo_original>
